<compile_context>
chip_gen: v5e
topology: v5e:2x2
jax: 0.10.0
libtpu: 0.0.40
codegen_flags: <defaults>
</compile_context>

<pallas_src>
import functools

import numpy as np
import jax
import jax.numpy as jnp
from jax.experimental import pallas as pl
from jax.experimental.pallas import tpu as pltpu


def _round_up(x, m):
    return ((x + m - 1) // m) * m


def actor_ppo_kernel(s_ref, w_ref, b_ref, out_ref):
    feat = w_ref.shape[1]          # 128-lane-padded feature width
    state_dim = s_ref.shape[1]     # natural (unpadded) state width
    apad = out_ref.shape[1]        # slim output lane width (action_dim padded to 8)

    # Static slices of the packed bf16 weight slab (zero runtime cost to form views).
    w1 = w_ref[0:state_dim, :]             # (state_dim, F)  state -> mid
    w2 = w_ref[feat:2 * feat, :]           # (F, F)          mid   -> mid
    w3 = w_ref[2 * feat:3 * feat, :]       # (F, F)          mid   -> action
    # Biases stay f32 so all elementwise math runs on the f32 VPU/EUP path (v5e-safe).
    b1 = b_ref[0:1, :]                     # (1, F)
    b2 = b_ref[1:2, :]                     # (1, F)
    b3 = b_ref[2:3, 0:apad]                # (1, apad)

    x = s_ref[...]                         # (tb, state_dim) bf16
    # bf16 MXU operands, f32 accumulation; bias/ReLU/tanh in f32.
    h1 = jnp.maximum(jnp.dot(x, w1, preferred_element_type=jnp.float32) + b1, 0.0)
    h2 = jnp.maximum(
        jnp.dot(h1.astype(jnp.bfloat16), w2, preferred_element_type=jnp.float32) + b2, 0.0)
    logits = jnp.dot(h2.astype(jnp.bfloat16), w3, preferred_element_type=jnp.float32)
    out_ref[...] = jnp.tanh(logits[:, 0:apad] + b3).astype(out_ref.dtype)


def pack_actor_params(w1, b1, w2, b2, w3, b3):
    """Pack weights (bf16) + biases (f32) into lane-padded slabs. Call ONCE at init.

    Weight slab (3F, F) bf16:  rows [0,F) = w1, [F,2F) = w2, [2F,3F) = w3 (zero-padded).
    Bias slab   (8,  F) f32 :  row 0 = b1, row 1 = b2, row 2 = b3 (zero-padded).
    Zero padding keeps the math exact for padded lanes/rows.
    """
    state_dim, mid_dim = w1.shape
    action_dim = w3.shape[1]
    feat = 128 * max(1, pl.cdiv(max(state_dim, mid_dim, action_dim), 128))

    w = jnp.zeros((3 * feat, feat), jnp.float32)
    w = w.at[0:state_dim, 0:mid_dim].set(w1.astype(jnp.float32))
    w = w.at[feat:feat + mid_dim, 0:mid_dim].set(w2.astype(jnp.float32))
    w = w.at[2 * feat:2 * feat + mid_dim, 0:action_dim].set(w3.astype(jnp.float32))
    w = w.astype(jnp.bfloat16)  # bf16 MXU operands: halves resident/streamed bytes

    b = jnp.zeros((8, feat), jnp.float32)
    b = b.at[0, 0:mid_dim].set(b1.reshape(-1).astype(jnp.float32))
    b = b.at[1, 0:mid_dim].set(b2.reshape(-1).astype(jnp.float32))
    b = b.at[2, 0:action_dim].set(b3.reshape(-1).astype(jnp.float32))
    return w, b


@functools.partial(jax.jit, static_argnames=("action_dim", "block_batch"))
def actor_ppo_forward(s, w_packed, b_packed, *, action_dim, block_batch=1024):
    batch, state_dim = s.shape
    feat = w_packed.shape[1]
    apad = 8 * max(1, pl.cdiv(action_dim, 8))   # slim (masked-vst) output lane width

    # Batch tile: multiple of 16 (bf16 sublane packing); aim for >=2 grid steps at
    # large batch so v7x's two TensorCores both get work; cap at block_batch.
    tb = min(block_batch, max(16, _round_up(pl.cdiv(batch, 2), 16)))
    pad_batch = _round_up(batch, tb)
    grid = (pad_batch // tb,)

    # Stream the state at natural lane width in bf16; only materialize a batch pad
    # when the tile doesn't divide the batch.
    s_in = s.astype(jnp.bfloat16)
    if pad_batch != batch:
        s_in = jnp.pad(s_in, ((0, pad_batch - batch), (0, 0)))

    flops = 2 * pad_batch * feat * (state_dim + 2 * feat)
    bytes_accessed = (2 * pad_batch * state_dim          # bf16 state read
                      + 2 * w_packed.size                # bf16 weight slab
                      + 4 * b_packed.size                # f32 bias slab
                      + 4 * pad_batch * apad)            # f32 output write

    out = pl.pallas_call(
        actor_ppo_kernel,
        out_shape=jax.ShapeDtypeStruct((pad_batch, apad), jnp.float32),
        grid=grid,
        in_specs=[
            pl.BlockSpec((tb, state_dim), lambda i: (i, 0)),   # state: streams per tile
            pl.BlockSpec(w_packed.shape, lambda i: (0, 0)),    # weights: VMEM-resident
            pl.BlockSpec(b_packed.shape, lambda i: (0, 0)),    # biases:  VMEM-resident
        ],
        out_specs=pl.BlockSpec((tb, apad), lambda i: (i, 0)),
        compiler_params=pltpu.CompilerParams(
            dimension_semantics=("parallel",)),
        cost_estimate=pl.CostEstimate(
            flops=flops,
            transcendentals=pad_batch * apad,   # tanh
            bytes_accessed=bytes_accessed),
    )(s_in, w_packed, b_packed)

    # Strip batch/lane padding -> (batch, action_dim).
    return out[:batch, :action_dim]


def orthogonal(key, rows, cols, gain):
    # Deterministic orthogonal init (matches torch.nn.init.orthogonal_ semantics).
    a = jax.random.normal(key, (max(rows, cols), min(rows, cols)), dtype=jnp.float32)
    q, r = jnp.linalg.qr(a)
    d = jnp.sign(jnp.diagonal(r))
    d = jnp.where(d == 0, 1.0, d)   # defensive: never zero a column
    q = q * d
    if rows < cols:
        q = q.T
    return gain * q[:rows, :cols]


def make_params(key, state_dim, mid_dim, action_dim):
    k1, k2, k3 = jax.random.split(key, 3)
    bias_const = 1e-6
    # PyTorch weight shape is (out, in); orthogonal_ applies to that shape.
    # Transpose to (in, out) for the x @ W convention used in the kernel.
    w1 = orthogonal(k1, mid_dim, state_dim, gain=1.0).T
    b1 = jnp.full((1, mid_dim), bias_const, dtype=jnp.float32)
    w2 = orthogonal(k2, mid_dim, mid_dim, gain=1.0).T
    b2 = jnp.full((1, mid_dim), bias_const, dtype=jnp.float32)
    w3 = orthogonal(k3, action_dim, mid_dim, gain=0.01).T
    b3 = jnp.full((1, action_dim), bias_const, dtype=jnp.float32)
    return w1, b1, w2, b2, w3, b3


if __name__ == "__main__":
    state_dim, mid_dim, action_dim = 16, 32, 4
    batch = 8

    key = jax.random.PRNGKey(0)
    k_params, k_state = jax.random.split(key)
    w1, b1, w2, b2, w3, b3 = make_params(k_params, state_dim, mid_dim, action_dim)
    s = jax.random.normal(k_state, (batch, state_dim), dtype=jnp.float32)

    # Pack once at init time (hoisted out of the per-call path).
    w_packed, b_packed = pack_actor_params(w1, b1, w2, b2, w3, b3)

    out = actor_ppo_forward(s, w_packed, b_packed, action_dim=action_dim)
    out = jax.block_until_ready(out)

    # Reference with identical numerics (bf16 MXU operands, f32 accumulate/elementwise).
    def dot_bf16(a, w):
        return jnp.dot(a.astype(jnp.bfloat16), w.astype(jnp.bfloat16),
                       preferred_element_type=jnp.float32)
    h1 = jnp.maximum(dot_bf16(s, w1) + b1, 0.0)
    h2 = jnp.maximum(dot_bf16(h1, w2) + b2, 0.0)
    ref = jnp.tanh(dot_bf16(h2, w3) + b3)
    np.testing.assert_allclose(np.asarray(out), np.asarray(ref), rtol=1e-2, atol=1e-3)

    # Loose sanity check against full-f32 math (bf16 operands => looser tolerance).
    h1f = jnp.maximum(s @ w1 + b1, 0.0)
    h2f = jnp.maximum(h1f @ w2 + b2, 0.0)
    reff = jnp.tanh(h2f @ w3 + b3)
    np.testing.assert_allclose(np.asarray(out), np.asarray(reff), rtol=5e-2, atol=5e-3)

    # TODO(synk): get__a__log_prob / compute__log_prob (Gaussian sampling + log-prob)
    # are not part of forward() and are left to plain JAX.

    print("KERNEL_OK")
</pallas_src>

<mosaic_0001>
module attributes {stable_mosaic.version = 11 : i64} {
  func.func @actor_ppo_kernel(%arg0: i32, %arg1: memref<16x16xbf16, #tpu.memory_space<vmem>>, %arg2: memref<384x128xbf16, #tpu.memory_space<vmem>>, %arg3: memref<8x128xf32, #tpu.memory_space<vmem>>, %arg4: memref<16x8xf32, #tpu.memory_space<vmem>>) attributes {dimension_semantics = [#tpu.dimension_semantics<parallel>], iteration_bounds = array<i64: 1>, scalar_prefetch = 0 : i64, scratch_operands = 0 : i64, tpu.core_type = #tpu.core_type<tc>, window_params = [{transform_indices = @transform_0, window_bounds = array<i64: 16, 16>}, {pipeline_mode = #tpu.pipeline_mode<synchronous>, transform_indices = @transform_1, window_bounds = array<i64: 384, 128>}, {pipeline_mode = #tpu.pipeline_mode<synchronous>, transform_indices = @transform_2, window_bounds = array<i64: 8, 128>}, {transform_indices = @transform_3, window_bounds = array<i64: 16, 8>}]} {
    %c0 = arith.constant 0 : index
    %c0_0 = arith.constant 0 : index
    %0 = vector.load %arg2[%c0, %c0_0] : memref<384x128xbf16, #tpu.memory_space<vmem>>, vector<16x128xbf16>
    %c128 = arith.constant 128 : index
    %c0_1 = arith.constant 0 : index
    %1 = vector.load %arg2[%c128, %c0_1] : memref<384x128xbf16, #tpu.memory_space<vmem>>, vector<128x128xbf16>
    %c256 = arith.constant 256 : index
    %c0_2 = arith.constant 0 : index
    %2 = vector.load %arg2[%c256, %c0_2] : memref<384x128xbf16, #tpu.memory_space<vmem>>, vector<128x128xbf16>
    %c0_3 = arith.constant 0 : index
    %c0_4 = arith.constant 0 : index
    %3 = vector.load %arg3[%c0_3, %c0_4] : memref<8x128xf32, #tpu.memory_space<vmem>>, vector<1x128xf32>
    %c1 = arith.constant 1 : index
    %c0_5 = arith.constant 0 : index
    %4 = vector.load %arg3[%c1, %c0_5] : memref<8x128xf32, #tpu.memory_space<vmem>>, vector<1x128xf32>
    %c2 = arith.constant 2 : index
    %c0_6 = arith.constant 0 : index
    %5 = vector.load %arg3[%c2, %c0_6] : memref<8x128xf32, #tpu.memory_space<vmem>>, vector<1x8xf32>
    %c0_7 = arith.constant 0 : index
    %c0_8 = arith.constant 0 : index
    %6 = vector.load %arg1[%c0_7, %c0_8] : memref<16x16xbf16, #tpu.memory_space<vmem>>, vector<16x16xbf16>
    %cst = arith.constant dense<0.000000e+00> : vector<16x128xf32>
    %7 = tpu.matmul %6, %0, %cst {dimension_numbers = #tpu.dot_dimension_numbers<[1], [0], [0], [1], [0, 0, 1, 1], [], []>} : vector<16x16xbf16>, vector<16x128xbf16>, vector<16x128xf32> -> vector<16x128xf32>
    %8 = vector.broadcast %3 : vector<1x128xf32> to vector<16x128xf32>
    %9 = arith.addf %7, %8 : vector<16x128xf32>
    %cst_9 = arith.constant 0.000000e+00 : f32
    %10 = vector.broadcast %cst_9 : f32 to vector<16x128xf32>
    %11 = arith.maximumf %9, %10 : vector<16x128xf32>
    %12 = arith.truncf %11 : vector<16x128xf32> to vector<16x128xbf16>
    %cst_10 = arith.constant dense<0.000000e+00> : vector<16x128xf32>
    %13 = tpu.matmul %12, %1, %cst_10 {dimension_numbers = #tpu.dot_dimension_numbers<[1], [0], [0], [1], [0, 0, 1, 1], [], []>} : vector<16x128xbf16>, vector<128x128xbf16>, vector<16x128xf32> -> vector<16x128xf32>
    %14 = vector.broadcast %4 : vector<1x128xf32> to vector<16x128xf32>
    %15 = arith.addf %13, %14 : vector<16x128xf32>
    %cst_11 = arith.constant 0.000000e+00 : f32
    %16 = vector.broadcast %cst_11 : f32 to vector<16x128xf32>
    %17 = arith.maximumf %15, %16 : vector<16x128xf32>
    %18 = arith.truncf %17 : vector<16x128xf32> to vector<16x128xbf16>
    %cst_12 = arith.constant dense<0.000000e+00> : vector<16x128xf32>
    %19 = tpu.matmul %18, %2, %cst_12 {dimension_numbers = #tpu.dot_dimension_numbers<[1], [0], [0], [1], [0, 0, 1, 1], [], []>} : vector<16x128xbf16>, vector<128x128xbf16>, vector<16x128xf32> -> vector<16x128xf32>
    %20 = vector.extract_strided_slice %19 {offsets = [0, 0], sizes = [16, 8], strides = [1, 1]} : vector<16x128xf32> to vector<16x8xf32>
    %21 = vector.broadcast %5 : vector<1x8xf32> to vector<16x8xf32>
    %22 = arith.addf %20, %21 : vector<16x8xf32>
    %23 = math.tanh %22 : vector<16x8xf32>
    %c0_13 = arith.constant 0 : index
    %c0_14 = arith.constant 0 : index
    %24 = vector.load %arg4[%c0_13, %c0_14] : memref<16x8xf32, #tpu.memory_space<vmem>>, vector<16x8xf32>
    tpu.vector_store %arg4[%c0_13, %c0_14], %23 {strides = array<i32>} : memref<16x8xf32, #tpu.memory_space<vmem>>, vector<16x8xf32>,
    return
  }
  func.func @transform_0(%arg0: i32) -> (i32, i32) {
    %c0_i32 = arith.constant 0 : i32
    %c0_i32_0 = arith.constant 0 : i32
    return %arg0, %c0_i32 : i32, i32
  }
  func.func @transform_1(%arg0: i32) -> (i32, i32) {
    %c0_i32 = arith.constant 0 : i32
    %c0_i32_0 = arith.constant 0 : i32
    %c0_i32_1 = arith.constant 0 : i32
    return %c0_i32, %c0_i32_0 : i32, i32
  }
  func.func @transform_2(%arg0: i32) -> (i32, i32) {
    %c0_i32 = arith.constant 0 : i32
    %c0_i32_0 = arith.constant 0 : i32
    %c0_i32_1 = arith.constant 0 : i32
    return %c0_i32, %c0_i32_0 : i32, i32
  }
  func.func @transform_3(%arg0: i32) -> (i32, i32) {
    %c0_i32 = arith.constant 0 : i32
    %c0_i32_0 = arith.constant 0 : i32
    return %arg0, %c0_i32 : i32, i32
  }
}

</mosaic_0001>

<llo_original>
// kernel: actor_ppo_forward.1
$region0: #{actor_ppo_forward.1}
  #allocation0 [shape = 'u32[]', space=smem, size = 0x4, offset = 0x4, fixed_abs, tag = 'smem constant byte address 0x4 - core index']
  #allocation1 [shape = 'u32[72,128]{1,0:T(1,128)}', space=vmem, size = 0x9000, scoped, tag = 'internal scratch']
  %s0 = inlined_call_operand.vmem [shape: bf16[16,16], index: 0, kind: input, shape index: {}]
  %s1 = inlined_call_operand.hbm [shape: bf16[384,128], index: 1, kind: input, shape index: {}]
  %s2 = inlined_call_operand.vmem [shape: f32[8,128], index: 2, kind: input, shape index: {}]
  %s3 = inlined_call_operand.vmem [shape: f32[16,8], index: 3, kind: output, shape index: {}]
  %s4 = sld [smem:[#allocation0]]
  $region26: #{actor_ppo_forward.1} parent=0
    _
  %s6 = ssub.s32 1, %s4
  %s7 = scalar_select 0, %s6, %s4
  $region1: #{actor_ppo_forward.1} parent=0
    #allocation2 [shape = 'u8[98304]{0}', space=vmem, size = 0x18000, scoped, tag = 'input window, operand 1, single buffered']
    #allocation3 [shape = 's32[1]{0}', space=sflag, size = 0x4, scoped, tag = 'scoped memory for actor_ppo_forward.1']
    %8 = vsyncpa [#allocation3], 0
    // Predicated region
    $region2: #{actor_ppo_forward.1} parent=1 // pred_check
      _
    $region3: #{actor_ppo_forward.1} parent=1 // pred_check_branch
      %10 = sbr.rel (0) target = $region5
    $region4: #{actor_ppo_forward.1} parent=1 // pred_region
      _
    $region5: #{actor_ppo_forward.1} parent=1 // pred_fallthru
      _
    // Predicated region
    $region6: #{actor_ppo_forward.1} parent=1 // pred_check
      _
    $region7: #{actor_ppo_forward.1} parent=1 // pred_check_branch
      %12 = sbr.rel (0) target = $region9
    $region8: #{actor_ppo_forward.1} parent=1 // pred_region
      %14 = vsyncadd [#allocation3], 0
      %s15 = sshll.u32 %s1, 4
      %s16 = int_to_ptr.hbm [resolvable:$true] %s15
      %s17 = sshll.u32 [#allocation2], 4
      %s18 = int_to_ptr.vmem [resolvable:$true] %s17
      %23 = dma.hbm_to_vmem [thread:$0]  %s16, 3072, %s18, [#allocation3], 64, 64, 4
    $region9: #{actor_ppo_forward.1} parent=1 // pred_fallthru
      _
    // Predicated region
    $region10: #{actor_ppo_forward.1} parent=1 // pred_check
      _
    $region11: #{actor_ppo_forward.1} parent=1 // pred_check_branch
      %25 = sbr.rel (0) target = $region13
    $region12: #{actor_ppo_forward.1} parent=1 // pred_region
      _
    $region13: #{actor_ppo_forward.1} parent=1 // pred_fallthru
      _
    // Predicated region
    $region14: #{actor_ppo_forward.1} parent=1 // pred_check
      _
    $region15: #{actor_ppo_forward.1} parent=1 // pred_check_branch
      %27 = sbr.rel (0) target = $region17
    $region16: #{actor_ppo_forward.1} parent=1 // pred_region
      %29 = dma.done [#allocation3], 3072
    $region17: #{actor_ppo_forward.1} parent=1 // pred_fallthru
      _
    %v31 = vld [vmem:[#allocation2] sm:$0xf]
    %v32 = vld [vmem:[#allocation2 + $0x4] sm:$0xf]
    %v33 = vld [vmem:[#allocation2 + $0x40] sm:$0xf]
    %v34 = vld [vmem:[#allocation2 + $0x44] sm:$0xf]
    %v35 = vld [vmem:[#allocation2 + $0x48] sm:$0xf]
    %v36 = vld [vmem:[#allocation2 + $0x4c] sm:$0xf]
    %v37 = vld [vmem:[#allocation2 + $0x50] sm:$0xf]
    %v38 = vld [vmem:[#allocation2 + $0x54] sm:$0xf]
    %v39 = vld [vmem:[#allocation2 + $0x58] sm:$0xf]
    %v40 = vld [vmem:[#allocation2 + $0x5c] sm:$0xf]
    %v41 = vld [vmem:[#allocation2 + $0x60] sm:$0xf]
    %v42 = vld [vmem:[#allocation2 + $0x64] sm:$0xf]
    %v43 = vld [vmem:[#allocation2 + $0x68] sm:$0xf]
    %v44 = vld [vmem:[#allocation2 + $0x6c] sm:$0xf]
    %v45 = vld [vmem:[#allocation2 + $0x70] sm:$0xf]
    %v46 = vld [vmem:[#allocation2 + $0x74] sm:$0xf]
    %v47 = vld [vmem:[#allocation2 + $0x78] sm:$0xf]
    %v48 = vld [vmem:[#allocation2 + $0x7c] sm:$0xf]
    %v49 = vld [vmem:[#allocation2 + $0x80] sm:$0xf]
    %v50 = vld [vmem:[#allocation2 + $0x84] sm:$0xf]
    %v51 = vld [vmem:[#allocation2 + $0x88] sm:$0xf]
    %v52 = vld [vmem:[#allocation2 + $0x8c] sm:$0xf]
    %v53 = vld [vmem:[#allocation2 + $0x90] sm:$0xf]
    %v54 = vld [vmem:[#allocation2 + $0x94] sm:$0xf]
    %v55 = vld [vmem:[#allocation2 + $0x98] sm:$0xf]
    %v56 = vld [vmem:[#allocation2 + $0x9c] sm:$0xf]
    %v57 = vld [vmem:[#allocation2 + $0xa0] sm:$0xf]
    %v58 = vld [vmem:[#allocation2 + $0xa4] sm:$0xf]
    %v59 = vld [vmem:[#allocation2 + $0xa8] sm:$0xf]
    %v60 = vld [vmem:[#allocation2 + $0xac] sm:$0xf]
    %v61 = vld [vmem:[#allocation2 + $0xb0] sm:$0xf]
    %v62 = vld [vmem:[#allocation2 + $0xb4] sm:$0xf]
    %v63 = vld [vmem:[#allocation2 + $0xb8] sm:$0xf]
    %v64 = vld [vmem:[#allocation2 + $0xbc] sm:$0xf]
    %v65 = vld [vmem:[%s2] sm:$0x1]
    %v66 = vld [vmem:[%s2 + $0x1] sm:$0x1]
    %v67 = vld [vmem:[%s2 + $0x2] sm:$0x1]
    %v68 = vld [vmem:[%s0] sm:$0xf]
    %v69 = vld [vmem:[%s0 + $0x4] sm:$0xf]
    %v70 = vperm.slane %v65, 0
    %v73 = vunpack.c.l.b16 %v68
    %v74 = vunpack.c.l.b16 %v69
    %v75 = vpack.c.b16 %v74, %v73
    %v78 = vunpack.c.l.b16 %v31
    %v79 = vunpack.c.l.b16 %v32
    %v80 = vpack.c.b16 %v79, %v78
    %vm82 = vcmask 130048
    %v84 = vsel %vm82, %v75, 0
    %86 = vmatpush.bf16.msra.mxu0 0
    %87 = vmatpush.bf16.msra.mxu0 0
    %88 = vmatpush.bf16.msra.mxu0 0
    %89 = vmatpush.bf16.msra.mxu0 0
    %90 = vmatpush.bf16.msra.mxu0 0
    %91 = vmatpush.bf16.msra.mxu0 0
    %92 = vmatpush.bf16.msra.mxu0 0
    %93 = vmatpush.bf16.msra.mxu0 %v80
    %94 = vmatmul.bf16.gmra.mxu0 %v84
    %v95 = vpop.f32.mrf.mxu0
    %v96 = vadd.f32 %v70, %v95
    %v97 = vpop.f32.mrf.mxu0
    %v98 = vadd.f32 %v70, %v97
    %99 = vdwg.mxu0
    %v100 = vmax.f32 %v96, 0.0
    %v101 = vmax.f32 %v98, 0.0
    %v102 = vpack.c.bf16 %v101, %v100
    %v103 = vperm.slane %v66, 0
    %v120 = vunpack.c.l.b16 %v33
    %v121 = vunpack.c.l.b16 %v34
    %v122 = vunpack.c.l.b16 %v35
    %v123 = vunpack.c.l.b16 %v36
    %v124 = vunpack.c.l.b16 %v37
    %v125 = vunpack.c.l.b16 %v38
    %v126 = vunpack.c.l.b16 %v39
    %v127 = vunpack.c.l.b16 %v40
    %v128 = vunpack.c.l.b16 %v41
    %v129 = vunpack.c.l.b16 %v42
    %v130 = vunpack.c.l.b16 %v43
    %v131 = vunpack.c.l.b16 %v44
    %v132 = vunpack.c.l.b16 %v45
    %v133 = vunpack.c.l.b16 %v46
    %v134 = vunpack.c.l.b16 %v47
    %v135 = vunpack.c.l.b16 %v48
    %v136 = vpack.c.b16 %v121, %v120
    %v137 = vpack.c.b16 %v123, %v122
    %v138 = vpack.c.b16 %v125, %v124
    %v139 = vpack.c.b16 %v127, %v126
    %v140 = vpack.c.b16 %v129, %v128
    %v141 = vpack.c.b16 %v131, %v130
    %v142 = vpack.c.b16 %v133, %v132
    %v143 = vpack.c.b16 %v135, %v134
    %152 = vmatpush.bf16.msra.mxu0 %v143
    %153 = vmatpush.bf16.msra.mxu0 %v142
    %154 = vmatpush.bf16.msra.mxu0 %v141
    %155 = vmatpush.bf16.msra.mxu0 %v140
    %156 = vmatpush.bf16.msra.mxu0 %v139
    %157 = vmatpush.bf16.msra.mxu0 %v138
    %158 = vmatpush.bf16.msra.mxu0 %v137
    %159 = vmatpush.bf16.msra.mxu0 %v136
    %160 = vmatmul.bf16.gmra.mxu0 %v102
    %v161 = vpop.f32.mrf.mxu0
    %v162 = vadd.f32 %v103, %v161
    %v163 = vpop.f32.mrf.mxu0
    %v164 = vadd.f32 %v103, %v163
    %165 = vdwg.mxu0
    %v166 = vmax.f32 %v162, 0.0
    %v167 = vmax.f32 %v164, 0.0
    %v168 = vpack.c.bf16 %v167, %v166
    %v185 = vunpack.c.l.b16 %v49
    %v186 = vunpack.c.l.b16 %v50
    %v187 = vunpack.c.l.b16 %v51
    %v188 = vunpack.c.l.b16 %v52
    %v189 = vunpack.c.l.b16 %v53
    %v190 = vunpack.c.l.b16 %v54
    %v191 = vunpack.c.l.b16 %v55
    %v192 = vunpack.c.l.b16 %v56
    %v193 = vunpack.c.l.b16 %v57
    %v194 = vunpack.c.l.b16 %v58
    %v195 = vunpack.c.l.b16 %v59
    %v196 = vunpack.c.l.b16 %v60
    %v197 = vunpack.c.l.b16 %v61
    %v198 = vunpack.c.l.b16 %v62
    %v199 = vunpack.c.l.b16 %v63
    %v200 = vunpack.c.l.b16 %v64
    %v201 = vpack.c.b16 %v186, %v185
    %v202 = vpack.c.b16 %v188, %v187
    %v203 = vpack.c.b16 %v190, %v189
    %v204 = vpack.c.b16 %v192, %v191
    %v205 = vpack.c.b16 %v194, %v193
    %v206 = vpack.c.b16 %v196, %v195
    %v207 = vpack.c.b16 %v198, %v197
    %v208 = vpack.c.b16 %v200, %v199
    %217 = vmatpush.bf16.msra.mxu0 %v208
    %218 = vmatpush.bf16.msra.mxu0 %v207
    %219 = vmatpush.bf16.msra.mxu0 %v206
    %220 = vmatpush.bf16.msra.mxu0 %v205
    %221 = vmatpush.bf16.msra.mxu0 %v204
    %222 = vmatpush.bf16.msra.mxu0 %v203
    %223 = vmatpush.bf16.msra.mxu0 %v202
    %224 = vmatpush.bf16.msra.mxu0 %v201
    %225 = vmatmul.bf16.gmra.mxu0 %v168
    %v226 = vpop.f32.mrf.mxu0
    %v227 = vadd.f32 0.0, %v226
    %v228 = vpop.f32.mrf.mxu0
    %v229 = vadd.f32 0.0, %v228
    %230 = vdwg.mxu0
    %v231 = vperm.slane %v67, 0
    %v232 = vadd.f32 %v227, %v231
    %v233 = vadd.f32 %v229, %v231
    %v234 = vtanh.pop %v232
    %v235 = vtanh.pop %v233
    %vm236 = vcmask 64512
    %237 = vst.msk [vmem:[%s3] sm:$0xff] %vm236, %v234
    %238 = vst.msk [vmem:[%s3 + $0x8] sm:$0xff] %vm236, %v235
    // Predicated region
    $region18: #{actor_ppo_forward.1} parent=1 // pred_check
      _
    $region19: #{actor_ppo_forward.1} parent=1 // pred_check_branch
      %240 = sbr.rel (0) target = $region21
    $region20: #{actor_ppo_forward.1} parent=1 // pred_region
      _
    $region21: #{actor_ppo_forward.1} parent=1 // pred_fallthru
      _
    // Predicated region
    $region22: #{actor_ppo_forward.1} parent=1 // pred_check
      _
    $region23: #{actor_ppo_forward.1} parent=1 // pred_check_branch
      %242 = sbr.rel (0) target = $region25
    $region24: #{actor_ppo_forward.1} parent=1 // pred_region
      _
    $region25: #{actor_ppo_forward.1} parent=1 // pred_fallthru
      _
    %243 = vsyncpa [#allocation3], 1

</llo_original>
